<compile_context>
chip_gen: v7x
topology: tpu7x:2x2x1
jax: 0.10.0
libtpu: 0.0.40
codegen_flags: <defaults>
</compile_context>

<pallas_src>
import jax
import jax.numpy as jnp
from jax.experimental import pallas as pl
from jax.experimental.pallas import tpu as pltpu

_LANES = 128


# ---------------------------------------------------------------------------
# Pallas kernel: one tile of TR "rows" x 128 lanes of the flattened batch.
# Emits a lane-dense (1, 8, 128) block of per-tile partial sums:
#   row 0: n_mask        row 1: sum(mask * (ce1 + ce2))
#   row 2: n_bin1        row 3: sum(bin1 * (sl1_sin1 + sl1_cos1))
#   row 4: n_bin2        row 5: sum(bin2 * (sl1_sin2 + sl1_cos2))
#   rows 6-7: zero padding (keeps the output block (8, 128) / unmasked vst).
# ---------------------------------------------------------------------------
def _bin_rot_tile_kernel(pred_ref, tbin_ref, sinr_ref, cosr_ref, mask_ref,
                         out_ref):
    # Per-quantity loads: each is a (TR, 128) slab -> full (8,128) vregs.
    p0 = pred_ref[0]
    p1 = pred_ref[1]
    p2 = pred_ref[2]
    p3 = pred_ref[3]
    p4 = pred_ref[4]
    p5 = pred_ref[5]
    p6 = pred_ref[6]
    p7 = pred_ref[7]
    b1 = tbin_ref[0]          # 0/1 bin-1 label (also residual validity)
    b2 = tbin_ref[1]          # 0/1 bin-2 label
    s1 = sinr_ref[0]          # sin(target_res[:, 0])
    s2 = sinr_ref[1]          # sin(target_res[:, 1])
    c1 = cosr_ref[0]          # cos(target_res[:, 0])
    c2 = cosr_ref[1]          # cos(target_res[:, 1])
    m = mask_ref[0]           # 0/1 gt-angle validity

    # ----- masked 2-class cross-entropy, both classifiers fused -------------
    # CE = lse(l0, l1) - l_label = softplus((l1 - l0) * (1 - 2*label)), stable.
    def softplus(d):
        return jnp.maximum(d, 0.0) + jnp.log(1.0 + jnp.exp(-jnp.abs(d)))

    d1 = (p1 - p0) * (1.0 - 2.0 * b1)
    d2 = (p5 - p4) * (1.0 - 2.0 * b2)
    ce_w = m * (softplus(d1) + softplus(d2))

    # ----- smooth-L1 residual loss, weighted by active-bin flags ------------
    def sl1(x, t):
        d = jnp.abs(x - t)
        return jnp.where(d < 1.0, 0.5 * d * d, d - 0.5)

    sl1_w = b1 * (sl1(p2, s1) + sl1(p3, c1))
    sl2_w = b2 * (sl1(p6, s2) + sl1(p7, c2))

    # ----- sublane-axis partial sums (lane + tile reduce happens in JAX) ----
    part = jnp.concatenate(
        [
            jnp.sum(m, axis=0, keepdims=True),
            jnp.sum(ce_w, axis=0, keepdims=True),
            jnp.sum(b1, axis=0, keepdims=True),
            jnp.sum(sl1_w, axis=0, keepdims=True),
            jnp.sum(b2, axis=0, keepdims=True),
            jnp.sum(sl2_w, axis=0, keepdims=True),
            jnp.zeros((2, _LANES), jnp.float32),
        ],
        axis=0,
    )                                            # (8, 128)
    out_ref[0] = part


# ---------------------------------------------------------------------------
# Wrapper: channel-major gather (no full NCHW transpose), lane-dense repack,
# gridded pallas_call, tiny scalar finish in JAX.
# ---------------------------------------------------------------------------
def bin_rot_loss(output, mask, ind, rotbin, rotres, *, use_pallas=True):
    """output: (N, 8, H, W); mask: (N, K); ind: (N, K); rotbin: (N, K, 2)
    with values in {0, 1}; rotres: (N, K, 2).  Returns scalar float32 loss.

    use_pallas=False falls back to the fused pure-JAX path, which is faster
    for tiny B (launch overhead dominates); the kernel pays off for large B
    or when fused into a bigger Pallas pipeline.
    """
    if not use_pallas:
        return _ref_loss(output, mask, ind, rotbin, rotres)

    N, C, H, W = output.shape
    assert C == 8, "rotation head must have 8 channels"
    K = ind.shape[1]
    B = N * K

    # Gather straight from the channel-major layout: (N, 8, H*W) -> (N, 8, K).
    # NOTE: out-of-range `ind` values are clamped by XLA (differs from torch
    # gather), which is benign because mask=0 at padded/invalid indices.
    feat = output.reshape(N, C, H * W)
    idx = jnp.broadcast_to(ind[:, None, :].astype(jnp.int32), (N, C, K))
    gathered = jnp.take_along_axis(feat, idx, axis=2)            # (N, 8, K)

    # Lane-dense per-quantity arrays, row-major over (N, K) on the last axis.
    rotres_f = rotres.astype(jnp.float32)
    pred = jnp.transpose(gathered, (1, 0, 2)).reshape(C, B).astype(jnp.float32)
    tbin = jnp.transpose(rotbin, (2, 0, 1)).reshape(2, B).astype(jnp.float32)
    sinr = jnp.transpose(jnp.sin(rotres_f), (2, 0, 1)).reshape(2, B)
    cosr = jnp.transpose(jnp.cos(rotres_f), (2, 0, 1)).reshape(2, B)
    msk = (mask.reshape(1, B) != 0).astype(jnp.float32)

    # Tile geometry: B -> (R, 128) rows x lanes; TR rows per grid step, TR a
    # multiple of 8 (full vregs).  15 quantity-rows * TR * 128 * 4B per step:
    # TR = 256 -> ~1.9 MiB (~3.9 MiB double-buffered), safe on v5e/v6e/v7x.
    r_needed = -(-B // _LANES)
    TR = min(256, ((max(r_needed, 8) + 7) // 8) * 8)
    R = ((r_needed + TR - 1) // TR) * TR
    Bpad = R * _LANES
    G = R // TR

    def to3d(x):
        rows = x.shape[0]
        # Pad columns get mask=0 / tbin=0, so they contribute nothing.
        x = jnp.pad(x, ((0, 0), (0, Bpad - B)))
        return x.reshape(rows, R, _LANES)

    pred3 = to3d(pred)
    tbin3 = to3d(tbin)
    sinr3 = to3d(sinr)
    cosr3 = to3d(cosr)
    msk3 = to3d(msk)

    partial = pl.pallas_call(
        _bin_rot_tile_kernel,
        out_shape=jax.ShapeDtypeStruct((G, 8, _LANES), jnp.float32),
        grid_spec=pltpu.PrefetchScalarGridSpec(
            num_scalar_prefetch=0,
            grid=(G,),
            in_specs=[
                pl.BlockSpec((8, TR, _LANES), lambda i: (0, i, 0)),
                pl.BlockSpec((2, TR, _LANES), lambda i: (0, i, 0)),
                pl.BlockSpec((2, TR, _LANES), lambda i: (0, i, 0)),
                pl.BlockSpec((2, TR, _LANES), lambda i: (0, i, 0)),
                pl.BlockSpec((1, TR, _LANES), lambda i: (0, i, 0)),
            ],
            out_specs=pl.BlockSpec((1, 8, _LANES), lambda i: (i, 0, 0)),
        ),
        compiler_params=pltpu.CompilerParams(
            dimension_semantics=("parallel",)),  # dual-TC shardable on v7x
    )(pred3, tbin3, sinr3, cosr3, msk3)

    # Tiny scalar finish in JAX: one reduce over tiles+lanes, then 3 divides.
    sums = jnp.sum(partial, axis=(0, 2))                         # (8,)
    n_mask, ce_sum = sums[0], sums[1]
    n1, sl1_sum = sums[2], sums[3]
    n2, sl2_sum = sums[4], sums[5]

    loss_bin = jnp.where(n_mask > 0, ce_sum / jnp.maximum(n_mask, 1.0), 0.0)
    res1 = jnp.where(n1 > 0, sl1_sum / jnp.maximum(n1, 1.0), 0.0)
    res2 = jnp.where(n2 > 0, sl2_sum / jnp.maximum(n2, 1.0), 0.0)
    return loss_bin + res1 + res2


# ---------------------------------------------------------------------------
# Pure-JAX reference of the PyTorch module (for correctness check / small-B
# fallback).
# ---------------------------------------------------------------------------
def _ref_loss(output, mask, ind, rotbin, rotres):
    N, C, H, W = output.shape
    K = ind.shape[1]
    feat = jnp.transpose(output, (0, 2, 3, 1)).reshape(N, H * W, C)
    idx = jnp.broadcast_to(ind[:, :, None].astype(jnp.int32), (N, K, C))
    pred = jnp.take_along_axis(feat, idx, axis=1)
    B = N * K
    o = pred.reshape(B, 8).astype(jnp.float32)
    tb = rotbin.reshape(B, 2).astype(jnp.int32)
    tr = rotres.reshape(B, 2).astype(jnp.float32)
    m = (mask.reshape(B) != 0).astype(jnp.float32)

    def ce(logits, lbl):
        lse = jax.nn.logsumexp(logits, axis=-1)
        sel = jnp.take_along_axis(logits, lbl[:, None], axis=-1)[:, 0]
        return lse - sel

    def mean_or_zero(vals, w):
        n = w.sum()
        return jnp.where(n > 0, (vals * w).sum() / jnp.maximum(n, 1.0), 0.0)

    loss_bin1 = mean_or_zero(ce(o[:, 0:2], tb[:, 0]), m)
    loss_bin2 = mean_or_zero(ce(o[:, 4:6], tb[:, 1]), m)

    def sl1(x, t):
        d = jnp.abs(x - t)
        return jnp.where(d < 1.0, 0.5 * d * d, d - 0.5)

    v1 = (tb[:, 0] != 0).astype(jnp.float32)
    v2 = (tb[:, 1] != 0).astype(jnp.float32)
    res1 = mean_or_zero(sl1(o[:, 2], jnp.sin(tr[:, 0])) +
                        sl1(o[:, 3], jnp.cos(tr[:, 0])), v1)
    res2 = mean_or_zero(sl1(o[:, 6], jnp.sin(tr[:, 1])) +
                        sl1(o[:, 7], jnp.cos(tr[:, 1])), v2)
    return loss_bin1 + loss_bin2 + res1 + res2


if __name__ == "__main__":
    key = jax.random.PRNGKey(0)
    k1, k2, k3, k4, k5 = jax.random.split(key, 5)

    N, C, H, W, K = 2, 8, 16, 16, 8   # small shapes consistent with the module
    output = jax.random.normal(k1, (N, C, H, W), dtype=jnp.float32)
    ind = jax.random.randint(k2, (N, K), 0, H * W, dtype=jnp.int32)
    mask = (jax.random.uniform(k3, (N, K)) > 0.3).astype(jnp.float32)
    rotbin = jax.random.randint(k4, (N, K, 2), 0, 2, dtype=jnp.int32)
    rotres = jax.random.uniform(k5, (N, K, 2), minval=-3.14, maxval=3.14,
                                dtype=jnp.float32)

    loss = jax.block_until_ready(
        bin_rot_loss(output, mask, ind, rotbin, rotres))
    ref = jax.block_until_ready(_ref_loss(output, mask, ind, rotbin, rotres))

    assert jnp.isfinite(loss), "loss is not finite"
    assert abs(float(loss) - float(ref)) < 1e-4 + 1e-4 * abs(float(ref)), (
        float(loss), float(ref))
    print("KERNEL_OK")
</pallas_src>

<mosaic_0001>
module attributes {stable_mosaic.version = 11 : i64} {
  func.func @_bin_rot_tile_kernel(%arg0: i32, %arg1: memref<8x8x128xf32, #tpu.memory_space<vmem>>, %arg2: memref<2x8x128xf32, #tpu.memory_space<vmem>>, %arg3: memref<2x8x128xf32, #tpu.memory_space<vmem>>, %arg4: memref<2x8x128xf32, #tpu.memory_space<vmem>>, %arg5: memref<1x8x128xf32, #tpu.memory_space<vmem>>, %arg6: memref<1x8x128xf32, #tpu.memory_space<vmem>>) attributes {dimension_semantics = [#tpu.dimension_semantics<parallel>], iteration_bounds = array<i64: 1>, scalar_prefetch = 0 : i64, scratch_operands = 0 : i64, tpu.core_type = #tpu.core_type<tc>, window_params = [{transform_indices = @transform_0, window_bounds = array<i64: 8, 8, 128>}, {transform_indices = @transform_1, window_bounds = array<i64: 2, 8, 128>}, {transform_indices = @transform_2, window_bounds = array<i64: 2, 8, 128>}, {transform_indices = @transform_3, window_bounds = array<i64: 2, 8, 128>}, {transform_indices = @transform_4, window_bounds = array<i64: 1, 8, 128>}, {transform_indices = @transform_5, window_bounds = array<i64: 1, 8, 128>}]} {
    %c0 = arith.constant 0 : index
    %c0_0 = arith.constant 0 : index
    %c0_1 = arith.constant 0 : index
    %0 = vector.load %arg1[%c0, %c0_0, %c0_1] : memref<8x8x128xf32, #tpu.memory_space<vmem>>, vector<1x8x128xf32>
    %1 = vector.shape_cast %0 : vector<1x8x128xf32> to vector<8x128xf32>
    %c1 = arith.constant 1 : index
    %c0_2 = arith.constant 0 : index
    %c0_3 = arith.constant 0 : index
    %2 = vector.load %arg1[%c1, %c0_2, %c0_3] : memref<8x8x128xf32, #tpu.memory_space<vmem>>, vector<1x8x128xf32>
    %3 = vector.shape_cast %2 : vector<1x8x128xf32> to vector<8x128xf32>
    %c2 = arith.constant 2 : index
    %c0_4 = arith.constant 0 : index
    %c0_5 = arith.constant 0 : index
    %4 = vector.load %arg1[%c2, %c0_4, %c0_5] : memref<8x8x128xf32, #tpu.memory_space<vmem>>, vector<1x8x128xf32>
    %5 = vector.shape_cast %4 : vector<1x8x128xf32> to vector<8x128xf32>
    %c3 = arith.constant 3 : index
    %c0_6 = arith.constant 0 : index
    %c0_7 = arith.constant 0 : index
    %6 = vector.load %arg1[%c3, %c0_6, %c0_7] : memref<8x8x128xf32, #tpu.memory_space<vmem>>, vector<1x8x128xf32>
    %7 = vector.shape_cast %6 : vector<1x8x128xf32> to vector<8x128xf32>
    %c4 = arith.constant 4 : index
    %c0_8 = arith.constant 0 : index
    %c0_9 = arith.constant 0 : index
    %8 = vector.load %arg1[%c4, %c0_8, %c0_9] : memref<8x8x128xf32, #tpu.memory_space<vmem>>, vector<1x8x128xf32>
    %9 = vector.shape_cast %8 : vector<1x8x128xf32> to vector<8x128xf32>
    %c5 = arith.constant 5 : index
    %c0_10 = arith.constant 0 : index
    %c0_11 = arith.constant 0 : index
    %10 = vector.load %arg1[%c5, %c0_10, %c0_11] : memref<8x8x128xf32, #tpu.memory_space<vmem>>, vector<1x8x128xf32>
    %11 = vector.shape_cast %10 : vector<1x8x128xf32> to vector<8x128xf32>
    %c6 = arith.constant 6 : index
    %c0_12 = arith.constant 0 : index
    %c0_13 = arith.constant 0 : index
    %12 = vector.load %arg1[%c6, %c0_12, %c0_13] : memref<8x8x128xf32, #tpu.memory_space<vmem>>, vector<1x8x128xf32>
    %13 = vector.shape_cast %12 : vector<1x8x128xf32> to vector<8x128xf32>
    %c7 = arith.constant 7 : index
    %c0_14 = arith.constant 0 : index
    %c0_15 = arith.constant 0 : index
    %14 = vector.load %arg1[%c7, %c0_14, %c0_15] : memref<8x8x128xf32, #tpu.memory_space<vmem>>, vector<1x8x128xf32>
    %15 = vector.shape_cast %14 : vector<1x8x128xf32> to vector<8x128xf32>
    %c0_16 = arith.constant 0 : index
    %c0_17 = arith.constant 0 : index
    %c0_18 = arith.constant 0 : index
    %16 = vector.load %arg2[%c0_16, %c0_17, %c0_18] : memref<2x8x128xf32, #tpu.memory_space<vmem>>, vector<1x8x128xf32>
    %17 = vector.shape_cast %16 : vector<1x8x128xf32> to vector<8x128xf32>
    %c1_19 = arith.constant 1 : index
    %c0_20 = arith.constant 0 : index
    %c0_21 = arith.constant 0 : index
    %18 = vector.load %arg2[%c1_19, %c0_20, %c0_21] : memref<2x8x128xf32, #tpu.memory_space<vmem>>, vector<1x8x128xf32>
    %19 = vector.shape_cast %18 : vector<1x8x128xf32> to vector<8x128xf32>
    %c0_22 = arith.constant 0 : index
    %c0_23 = arith.constant 0 : index
    %c0_24 = arith.constant 0 : index
    %20 = vector.load %arg3[%c0_22, %c0_23, %c0_24] : memref<2x8x128xf32, #tpu.memory_space<vmem>>, vector<1x8x128xf32>
    %21 = vector.shape_cast %20 : vector<1x8x128xf32> to vector<8x128xf32>
    %c1_25 = arith.constant 1 : index
    %c0_26 = arith.constant 0 : index
    %c0_27 = arith.constant 0 : index
    %22 = vector.load %arg3[%c1_25, %c0_26, %c0_27] : memref<2x8x128xf32, #tpu.memory_space<vmem>>, vector<1x8x128xf32>
    %23 = vector.shape_cast %22 : vector<1x8x128xf32> to vector<8x128xf32>
    %c0_28 = arith.constant 0 : index
    %c0_29 = arith.constant 0 : index
    %c0_30 = arith.constant 0 : index
    %24 = vector.load %arg4[%c0_28, %c0_29, %c0_30] : memref<2x8x128xf32, #tpu.memory_space<vmem>>, vector<1x8x128xf32>
    %25 = vector.shape_cast %24 : vector<1x8x128xf32> to vector<8x128xf32>
    %c1_31 = arith.constant 1 : index
    %c0_32 = arith.constant 0 : index
    %c0_33 = arith.constant 0 : index
    %26 = vector.load %arg4[%c1_31, %c0_32, %c0_33] : memref<2x8x128xf32, #tpu.memory_space<vmem>>, vector<1x8x128xf32>
    %27 = vector.shape_cast %26 : vector<1x8x128xf32> to vector<8x128xf32>
    %c0_34 = arith.constant 0 : index
    %c0_35 = arith.constant 0 : index
    %c0_36 = arith.constant 0 : index
    %28 = vector.load %arg5[%c0_34, %c0_35, %c0_36] : memref<1x8x128xf32, #tpu.memory_space<vmem>>, vector<1x8x128xf32>
    %29 = vector.shape_cast %28 : vector<1x8x128xf32> to vector<8x128xf32>
    %30 = arith.subf %3, %1 : vector<8x128xf32>
    %cst = arith.constant 2.000000e+00 : f32
    %31 = vector.broadcast %cst : f32 to vector<8x128xf32>
    %32 = arith.mulf %31, %17 : vector<8x128xf32>
    %cst_37 = arith.constant 1.000000e+00 : f32
    %33 = vector.broadcast %cst_37 : f32 to vector<8x128xf32>
    %34 = arith.subf %33, %32 : vector<8x128xf32>
    %35 = arith.mulf %30, %34 : vector<8x128xf32>
    %36 = arith.subf %11, %9 : vector<8x128xf32>
    %cst_38 = arith.constant 2.000000e+00 : f32
    %37 = vector.broadcast %cst_38 : f32 to vector<8x128xf32>
    %38 = arith.mulf %37, %19 : vector<8x128xf32>
    %cst_39 = arith.constant 1.000000e+00 : f32
    %39 = vector.broadcast %cst_39 : f32 to vector<8x128xf32>
    %40 = arith.subf %39, %38 : vector<8x128xf32>
    %41 = arith.mulf %36, %40 : vector<8x128xf32>
    %cst_40 = arith.constant 0.000000e+00 : f32
    %42 = vector.broadcast %cst_40 : f32 to vector<8x128xf32>
    %43 = arith.maximumf %35, %42 : vector<8x128xf32>
    %44 = math.absf %35 : vector<8x128xf32>
    %cst_41 = arith.constant 0.000000e+00 : f32
    %45 = vector.broadcast %cst_41 : f32 to vector<8x128xf32>
    %46 = arith.subf %45, %44 : vector<8x128xf32>
    %47 = math.exp %46 : vector<8x128xf32>
    %cst_42 = arith.constant 1.000000e+00 : f32
    %48 = vector.broadcast %cst_42 : f32 to vector<8x128xf32>
    %49 = arith.addf %48, %47 : vector<8x128xf32>
    %50 = math.log %49 : vector<8x128xf32>
    %51 = arith.addf %43, %50 : vector<8x128xf32>
    %cst_43 = arith.constant 0.000000e+00 : f32
    %52 = vector.broadcast %cst_43 : f32 to vector<8x128xf32>
    %53 = arith.maximumf %41, %52 : vector<8x128xf32>
    %54 = math.absf %41 : vector<8x128xf32>
    %cst_44 = arith.constant 0.000000e+00 : f32
    %55 = vector.broadcast %cst_44 : f32 to vector<8x128xf32>
    %56 = arith.subf %55, %54 : vector<8x128xf32>
    %57 = math.exp %56 : vector<8x128xf32>
    %cst_45 = arith.constant 1.000000e+00 : f32
    %58 = vector.broadcast %cst_45 : f32 to vector<8x128xf32>
    %59 = arith.addf %58, %57 : vector<8x128xf32>
    %60 = math.log %59 : vector<8x128xf32>
    %61 = arith.addf %53, %60 : vector<8x128xf32>
    %62 = arith.addf %51, %61 : vector<8x128xf32>
    %63 = arith.mulf %29, %62 : vector<8x128xf32>
    %64 = arith.subf %5, %21 : vector<8x128xf32>
    %65 = math.absf %64 : vector<8x128xf32>
    %cst_46 = arith.constant 1.000000e+00 : f32
    %66 = vector.broadcast %cst_46 : f32 to vector<8x128xf32>
    %67 = arith.cmpf olt, %65, %66 : vector<8x128xf32>
    %cst_47 = arith.constant 5.000000e-01 : f32
    %68 = vector.broadcast %cst_47 : f32 to vector<8x128xf32>
    %69 = arith.mulf %68, %65 : vector<8x128xf32>
    %70 = arith.mulf %69, %65 : vector<8x128xf32>
    %cst_48 = arith.constant 5.000000e-01 : f32
    %71 = vector.broadcast %cst_48 : f32 to vector<8x128xf32>
    %72 = arith.subf %65, %71 : vector<8x128xf32>
    %73 = arith.select %67, %70, %72 : vector<8x128xi1>, vector<8x128xf32>
    %74 = arith.subf %7, %25 : vector<8x128xf32>
    %75 = math.absf %74 : vector<8x128xf32>
    %cst_49 = arith.constant 1.000000e+00 : f32
    %76 = vector.broadcast %cst_49 : f32 to vector<8x128xf32>
    %77 = arith.cmpf olt, %75, %76 : vector<8x128xf32>
    %cst_50 = arith.constant 5.000000e-01 : f32
    %78 = vector.broadcast %cst_50 : f32 to vector<8x128xf32>
    %79 = arith.mulf %78, %75 : vector<8x128xf32>
    %80 = arith.mulf %79, %75 : vector<8x128xf32>
    %cst_51 = arith.constant 5.000000e-01 : f32
    %81 = vector.broadcast %cst_51 : f32 to vector<8x128xf32>
    %82 = arith.subf %75, %81 : vector<8x128xf32>
    %83 = arith.select %77, %80, %82 : vector<8x128xi1>, vector<8x128xf32>
    %84 = arith.addf %73, %83 : vector<8x128xf32>
    %85 = arith.mulf %17, %84 : vector<8x128xf32>
    %86 = arith.subf %13, %23 : vector<8x128xf32>
    %87 = math.absf %86 : vector<8x128xf32>
    %cst_52 = arith.constant 1.000000e+00 : f32
    %88 = vector.broadcast %cst_52 : f32 to vector<8x128xf32>
    %89 = arith.cmpf olt, %87, %88 : vector<8x128xf32>
    %cst_53 = arith.constant 5.000000e-01 : f32
    %90 = vector.broadcast %cst_53 : f32 to vector<8x128xf32>
    %91 = arith.mulf %90, %87 : vector<8x128xf32>
    %92 = arith.mulf %91, %87 : vector<8x128xf32>
    %cst_54 = arith.constant 5.000000e-01 : f32
    %93 = vector.broadcast %cst_54 : f32 to vector<8x128xf32>
    %94 = arith.subf %87, %93 : vector<8x128xf32>
    %95 = arith.select %89, %92, %94 : vector<8x128xi1>, vector<8x128xf32>
    %96 = arith.subf %15, %27 : vector<8x128xf32>
    %97 = math.absf %96 : vector<8x128xf32>
    %cst_55 = arith.constant 1.000000e+00 : f32
    %98 = vector.broadcast %cst_55 : f32 to vector<8x128xf32>
    %99 = arith.cmpf olt, %97, %98 : vector<8x128xf32>
    %cst_56 = arith.constant 5.000000e-01 : f32
    %100 = vector.broadcast %cst_56 : f32 to vector<8x128xf32>
    %101 = arith.mulf %100, %97 : vector<8x128xf32>
    %102 = arith.mulf %101, %97 : vector<8x128xf32>
    %cst_57 = arith.constant 5.000000e-01 : f32
    %103 = vector.broadcast %cst_57 : f32 to vector<8x128xf32>
    %104 = arith.subf %97, %103 : vector<8x128xf32>
    %105 = arith.select %99, %102, %104 : vector<8x128xi1>, vector<8x128xf32>
    %106 = arith.addf %95, %105 : vector<8x128xf32>
    %107 = arith.mulf %19, %106 : vector<8x128xf32>
    %cst_58 = arith.constant dense<0.000000e+00> : vector<128xf32>
    %108 = vector.multi_reduction <add>, %29, %cst_58 [0] : vector<8x128xf32> to vector<128xf32>
    %109 = vector.shape_cast %108 : vector<128xf32> to vector<1x128xf32>
    %cst_59 = arith.constant dense<0.000000e+00> : vector<128xf32>
    %110 = vector.multi_reduction <add>, %63, %cst_59 [0] : vector<8x128xf32> to vector<128xf32>
    %111 = vector.shape_cast %110 : vector<128xf32> to vector<1x128xf32>
    %cst_60 = arith.constant dense<0.000000e+00> : vector<128xf32>
    %112 = vector.multi_reduction <add>, %17, %cst_60 [0] : vector<8x128xf32> to vector<128xf32>
    %113 = vector.shape_cast %112 : vector<128xf32> to vector<1x128xf32>
    %cst_61 = arith.constant dense<0.000000e+00> : vector<128xf32>
    %114 = vector.multi_reduction <add>, %85, %cst_61 [0] : vector<8x128xf32> to vector<128xf32>
    %115 = vector.shape_cast %114 : vector<128xf32> to vector<1x128xf32>
    %cst_62 = arith.constant dense<0.000000e+00> : vector<128xf32>
    %116 = vector.multi_reduction <add>, %19, %cst_62 [0] : vector<8x128xf32> to vector<128xf32>
    %117 = vector.shape_cast %116 : vector<128xf32> to vector<1x128xf32>
    %cst_63 = arith.constant dense<0.000000e+00> : vector<128xf32>
    %118 = vector.multi_reduction <add>, %107, %cst_63 [0] : vector<8x128xf32> to vector<128xf32>
    %119 = vector.shape_cast %118 : vector<128xf32> to vector<1x128xf32>
    %cst_64 = arith.constant 0.000000e+00 : f32
    %120 = vector.broadcast %cst_64 : f32 to vector<2x128xf32>
    %121 = tpu.concatenate %109, %111, %113, %115, %117, %119, %120 in 0 : vector<1x128xf32>, vector<1x128xf32>, vector<1x128xf32>, vector<1x128xf32>, vector<1x128xf32>, vector<1x128xf32>, vector<2x128xf32> -> vector<8x128xf32>
    %c0_65 = arith.constant 0 : index
    %c0_66 = arith.constant 0 : index
    %c0_67 = arith.constant 0 : index
    %122 = vector.load %arg6[%c0_65, %c0_66, %c0_67] : memref<1x8x128xf32, #tpu.memory_space<vmem>>, vector<1x8x128xf32>
    %123 = vector.shape_cast %122 : vector<1x8x128xf32> to vector<8x128xf32>
    %124 = vector.shape_cast %121 : vector<8x128xf32> to vector<1x8x128xf32>
    tpu.vector_store %arg6[%c0_65, %c0_66, %c0_67], %124 {strides = array<i32>} : memref<1x8x128xf32, #tpu.memory_space<vmem>>, vector<1x8x128xf32>,
    return
  }
  func.func @transform_0(%arg0: i32) -> (i32, i32, i32) {
    %c0_i32 = arith.constant 0 : i32
    %c0_i32_0 = arith.constant 0 : i32
    %c0_i32_1 = arith.constant 0 : i32
    return %c0_i32, %arg0, %c0_i32_0 : i32, i32, i32
  }
  func.func @transform_1(%arg0: i32) -> (i32, i32, i32) {
    %c0_i32 = arith.constant 0 : i32
    %c0_i32_0 = arith.constant 0 : i32
    %c0_i32_1 = arith.constant 0 : i32
    return %c0_i32, %arg0, %c0_i32_0 : i32, i32, i32
  }
  func.func @transform_2(%arg0: i32) -> (i32, i32, i32) {
    %c0_i32 = arith.constant 0 : i32
    %c0_i32_0 = arith.constant 0 : i32
    %c0_i32_1 = arith.constant 0 : i32
    return %c0_i32, %arg0, %c0_i32_0 : i32, i32, i32
  }
  func.func @transform_3(%arg0: i32) -> (i32, i32, i32) {
    %c0_i32 = arith.constant 0 : i32
    %c0_i32_0 = arith.constant 0 : i32
    %c0_i32_1 = arith.constant 0 : i32
    return %c0_i32, %arg0, %c0_i32_0 : i32, i32, i32
  }
  func.func @transform_4(%arg0: i32) -> (i32, i32, i32) {
    %c0_i32 = arith.constant 0 : i32
    %c0_i32_0 = arith.constant 0 : i32
    %c0_i32_1 = arith.constant 0 : i32
    return %c0_i32, %arg0, %c0_i32_0 : i32, i32, i32
  }
  func.func @transform_5(%arg0: i32) -> (i32, i32, i32) {
    %c0_i32 = arith.constant 0 : i32
    %c0_i32_0 = arith.constant 0 : i32
    %c0_i32_1 = arith.constant 0 : i32
    return %arg0, %c0_i32, %c0_i32_0 : i32, i32, i32
  }
}

</mosaic_0001>

<llo_original>
// kernel: tpu_custom_call.1
$region0: #{tpu_custom_call.1}
  #allocation0 [shape = 'u32[]', space=smem, size = 0x4, offset = 0x4, fixed_abs, tag = 'smem constant byte address 0x4 - core index']
  #allocation1 [shape = 'u32[144,128]{1,0:T(1,128)}', space=vmem, size = 0x12000, scoped, tag = 'internal scratch']
  %s0 = inlined_call_operand.hbm [shape: f32[8,8,128], index: 0, kind: input, shape index: {}]
  %s1 = inlined_call_operand.hbm [shape: f32[2,8,128], index: 1, kind: input, shape index: {}]
  %s2 = inlined_call_operand.hbm [shape: f32[2,8,128], index: 2, kind: input, shape index: {}]
  %s3 = inlined_call_operand.hbm [shape: f32[2,8,128], index: 3, kind: input, shape index: {}]
  %s4 = inlined_call_operand.vmem [shape: f32[1,8,128], index: 4, kind: input, shape index: {}]
  %s5 = inlined_call_operand.hbm [shape: f32[1,8,128], index: 5, kind: output, shape index: {}]
  %s6 = sld [smem:[#allocation0]]
  $region46: #{tpu_custom_call.1} parent=0
    _
  %s8 = ssub.s32 1, %s6
  %s9 = scalar_select 0, %s8, %s6
  $region1: #{tpu_custom_call.1} parent=0
    #allocation2 [shape = 'u8[32768]{0}', space=vmem, size = 0x8000, scoped, tag = 'input window, operand 0, single buffered']
    #allocation3 [shape = 's32[1]{0}', space=sflag, size = 0x4, scoped, tag = 'scoped memory for tpu_custom_call.1']
    #allocation4 [shape = 's32[1]{0}', space=sflag, size = 0x4, scoped, tag = 'scoped memory for tpu_custom_call.1']
    #allocation5 [shape = 'u8[8192]{0}', space=vmem, size = 0x2000, scoped, tag = 'input window, operand 1, single buffered']
    #allocation6 [shape = 's32[1]{0}', space=sflag, size = 0x4, scoped, tag = 'scoped memory for tpu_custom_call.1']
    #allocation7 [shape = 'u8[8192]{0}', space=vmem, size = 0x2000, scoped, tag = 'input window, operand 2, single buffered']
    #allocation8 [shape = 'u8[8192]{0}', space=vmem, size = 0x2000, scoped, tag = 'input window, operand 3, single buffered']
    #allocation9 [shape = 's32[1]{0}', space=sflag, size = 0x4, scoped, tag = 'scoped memory for tpu_custom_call.1']
    #allocation10 [shape = 'u8[4096]{0}', space=vmem, size = 0x1000, scoped, tag = 'output window, operand 0, single buffered']
    %10 = vsyncpa [#allocation3], 0
    %11 = vsyncpa [#allocation6], 0
    %12 = vsyncpa [#allocation9], 0
    %13 = vsyncpa [#allocation4], 0
    // Predicated region
    $region2: #{tpu_custom_call.1} parent=1 // pred_check
      _
    $region3: #{tpu_custom_call.1} parent=1 // pred_check_branch
      %15 = sbr.rel (0) target = $region5
    $region4: #{tpu_custom_call.1} parent=1 // pred_region
      %s17 = ssub.s32 1024, 1024
      %18 = vsyncadd [#allocation3], %s17
      %s19 = sshll.u32 [#allocation2], 4
      %s20 = int_to_ptr.vmem [resolvable:$true] %s19
      %25 = dma.hbm_to_vmem [thread:$0]  %s0, 1024, %s20, [#allocation3], 128, 128, 8
    $region5: #{tpu_custom_call.1} parent=1 // pred_fallthru
      _
    // Predicated region
    $region6: #{tpu_custom_call.1} parent=1 // pred_check
      _
    $region7: #{tpu_custom_call.1} parent=1 // pred_check_branch
      %27 = sbr.rel (0) target = $region9
    $region8: #{tpu_custom_call.1} parent=1 // pred_region
      %s29 = ssub.s32 256, 256
      %30 = vsyncadd [#allocation6], %s29
      %s31 = sshll.u32 [#allocation5], 4
      %s32 = int_to_ptr.vmem [resolvable:$true] %s31
      %37 = dma.hbm_to_vmem [thread:$0]  %s1, 256, %s32, [#allocation6], 128, 128, 8
    $region9: #{tpu_custom_call.1} parent=1 // pred_fallthru
      _
    // Predicated region
    $region10: #{tpu_custom_call.1} parent=1 // pred_check
      _
    $region11: #{tpu_custom_call.1} parent=1 // pred_check_branch
      %39 = sbr.rel (0) target = $region13
    $region12: #{tpu_custom_call.1} parent=1 // pred_region
      %s41 = ssub.s32 256, 256
      %42 = vsyncadd [#allocation6], %s41
      %s43 = sshll.u32 [#allocation7], 4
      %s44 = int_to_ptr.vmem [resolvable:$true] %s43
      %49 = dma.hbm_to_vmem [thread:$0]  %s2, 256, %s44, [#allocation6], 128, 128, 8
    $region13: #{tpu_custom_call.1} parent=1 // pred_fallthru
      _
    // Predicated region
    $region14: #{tpu_custom_call.1} parent=1 // pred_check
      _
    $region15: #{tpu_custom_call.1} parent=1 // pred_check_branch
      %51 = sbr.rel (0) target = $region17
    $region16: #{tpu_custom_call.1} parent=1 // pred_region
      %s53 = ssub.s32 256, 256
      %54 = vsyncadd [#allocation9], %s53
      %s55 = sshll.u32 [#allocation8], 4
      %s56 = int_to_ptr.vmem [resolvable:$true] %s55
      %61 = dma.hbm_to_vmem [thread:$0]  %s3, 256, %s56, [#allocation9], 128, 128, 8
    $region17: #{tpu_custom_call.1} parent=1 // pred_fallthru
      _
    // Predicated region
    $region18: #{tpu_custom_call.1} parent=1 // pred_check
      _
    $region19: #{tpu_custom_call.1} parent=1 // pred_check_branch
      %63 = sbr.rel (0) target = $region21
    $region20: #{tpu_custom_call.1} parent=1 // pred_region
      _
    $region21: #{tpu_custom_call.1} parent=1 // pred_fallthru
      _
    // Predicated region
    $region22: #{tpu_custom_call.1} parent=1 // pred_check
      _
    $region23: #{tpu_custom_call.1} parent=1 // pred_check_branch
      %65 = sbr.rel (0) target = $region25
    $region24: #{tpu_custom_call.1} parent=1 // pred_region
      %66 = dma.done [#allocation3], 1024
    $region25: #{tpu_custom_call.1} parent=1 // pred_fallthru
      _
    // Predicated region
    $region26: #{tpu_custom_call.1} parent=1 // pred_check
      _
    $region27: #{tpu_custom_call.1} parent=1 // pred_check_branch
      %68 = sbr.rel (0) target = $region29
    $region28: #{tpu_custom_call.1} parent=1 // pred_region
      %69 = dma.done [#allocation6], 256
    $region29: #{tpu_custom_call.1} parent=1 // pred_fallthru
      _
    // Predicated region
    $region30: #{tpu_custom_call.1} parent=1 // pred_check
      _
    $region31: #{tpu_custom_call.1} parent=1 // pred_check_branch
      %71 = sbr.rel (0) target = $region33
    $region32: #{tpu_custom_call.1} parent=1 // pred_region
      %72 = dma.done [#allocation6], 256
    $region33: #{tpu_custom_call.1} parent=1 // pred_fallthru
      _
    // Predicated region
    $region34: #{tpu_custom_call.1} parent=1 // pred_check
      _
    $region35: #{tpu_custom_call.1} parent=1 // pred_check_branch
      %74 = sbr.rel (0) target = $region37
    $region36: #{tpu_custom_call.1} parent=1 // pred_region
      %75 = dma.done [#allocation9], 256
    $region37: #{tpu_custom_call.1} parent=1 // pred_fallthru
      _
    %v76 = vld [vmem:[#allocation2] sm:$0xff]
    %s77 = scalar_lea.vmem [#allocation2], 8
    %v78 = vld [vmem:[%s77] sm:$0xff]
    %s79 = scalar_lea.vmem [#allocation2], 16
    %v80 = vld [vmem:[%s79] sm:$0xff]
    %s81 = scalar_lea.vmem [#allocation2], 24
    %v82 = vld [vmem:[%s81] sm:$0xff]
    %s83 = scalar_lea.vmem [#allocation2], 32
    %v84 = vld [vmem:[%s83] sm:$0xff]
    %s85 = scalar_lea.vmem [#allocation2], 40
    %v86 = vld [vmem:[%s85] sm:$0xff]
    %s87 = scalar_lea.vmem [#allocation2], 48
    %v88 = vld [vmem:[%s87] sm:$0xff]
    %s89 = scalar_lea.vmem [#allocation2], 56
    %v90 = vld [vmem:[%s89] sm:$0xff]
    %v91 = vld [vmem:[#allocation5] sm:$0xff]
    %s92 = scalar_lea.vmem [#allocation5], 8
    %v93 = vld [vmem:[%s92] sm:$0xff]
    %v94 = vld [vmem:[#allocation7] sm:$0xff]
    %s95 = scalar_lea.vmem [#allocation7], 8
    %v96 = vld [vmem:[%s95] sm:$0xff]
    %v97 = vld [vmem:[#allocation8] sm:$0xff]
    %s98 = scalar_lea.vmem [#allocation8], 8
    %v99 = vld [vmem:[%s98] sm:$0xff]
    %v100 = vld [vmem:[%s4] sm:$0xff]
    %v101 = vsub.f32 %v78, %v76
    %v102 = vmul.f32 %v91, 2.0
    %v103 = vsub.f32 1.0, %v102
    %v104 = vmul.f32 %v101, %v103
    %v105 = vsub.f32 %v86, %v84
    %v106 = vmul.f32 %v93, 2.0
    %v107 = vsub.f32 1.0, %v106
    %v108 = vmul.f32 %v105, %v107
    %v109 = vmax.f32 %v104, 0.0
    %v110 = vand.u32 2147483647, %v104
    %v111 = vsub.f32 0.0, %v110
    %v112 = vmul.f32 %v111, 1.442695
    %v113 = vpow.pop %v112
    %v114 = vadd.f32 %v113, 1.0
    %v115 = vlog2.pop %v114
    %v116 = vmul.f32 %v115, 0.6931472
    %v117 = vadd.f32 %v109, %v116
    %v118 = vmax.f32 %v108, 0.0
    %v119 = vand.u32 2147483647, %v108
    %v120 = vsub.f32 0.0, %v119
    %v121 = vmul.f32 %v120, 1.442695
    %v122 = vpow.pop %v121
    %v123 = vadd.f32 %v122, 1.0
    %v124 = vlog2.pop %v123
    %v125 = vmul.f32 %v124, 0.6931472
    %v126 = vadd.f32 %v118, %v125
    %v127 = vadd.f32 %v117, %v126
    %v128 = vmul.f32 %v100, %v127
    %v129 = vsub.f32 %v80, %v94
    %v130 = vand.u32 2147483647, %v129
    %vm131 = vcmp.lt.f32.partialorder %v130, 1.0
    %v132 = vmul.f32 %v130, 0.5
    %v133 = vmul.f32 %v132, %v130
    %v134 = vsub.f32 %v130, 0.5
    %v135 = vsel %vm131, %v133, %v134
    %v136 = vsub.f32 %v82, %v97
    %v137 = vand.u32 2147483647, %v136
    %vm138 = vcmp.lt.f32.partialorder %v137, 1.0
    %v139 = vmul.f32 %v137, 0.5
    %v140 = vmul.f32 %v139, %v137
    %v141 = vsub.f32 %v137, 0.5
    %v142 = vsel %vm138, %v140, %v141
    %v143 = vadd.f32 %v135, %v142
    %v144 = vmul.f32 %v91, %v143
    %v145 = vsub.f32 %v88, %v96
    %v146 = vand.u32 2147483647, %v145
    %vm147 = vcmp.lt.f32.partialorder %v146, 1.0
    %v148 = vmul.f32 %v146, 0.5
    %v149 = vmul.f32 %v148, %v146
    %v150 = vsub.f32 %v146, 0.5
    %v151 = vsel %vm147, %v149, %v150
    %v152 = vsub.f32 %v90, %v99
    %v153 = vand.u32 2147483647, %v152
    %vm154 = vcmp.lt.f32.partialorder %v153, 1.0
    %v155 = vmul.f32 %v153, 0.5
    %v156 = vmul.f32 %v155, %v153
    %v157 = vsub.f32 %v153, 0.5
    %v158 = vsel %vm154, %v156, %v157
    %v159 = vadd.f32 %v151, %v158
    %v160 = vmul.f32 %v93, %v159
    %v161 = vrot.slane %v100, 4
    %v162 = vadd.f32 %v100, %v161
    %v163 = vrot.slane %v162, 2
    %v164 = vadd.f32 %v162, %v163
    %v165 = vrot.slane %v164, 1
    %v166 = vadd.f32 %v164, %v165
    %v167 = vrot.slane %v128, 4
    %v168 = vadd.f32 %v128, %v167
    %v169 = vrot.slane %v168, 2
    %v170 = vadd.f32 %v168, %v169
    %v171 = vrot.slane %v170, 1
    %v172 = vadd.f32 %v170, %v171
    %v173 = vrot.slane %v91, 4
    %v174 = vadd.f32 %v91, %v173
    %v175 = vrot.slane %v174, 2
    %v176 = vadd.f32 %v174, %v175
    %v177 = vrot.slane %v176, 1
    %v178 = vadd.f32 %v176, %v177
    %v179 = vrot.slane %v144, 4
    %v180 = vadd.f32 %v144, %v179
    %v181 = vrot.slane %v180, 2
    %v182 = vadd.f32 %v180, %v181
    %v183 = vrot.slane %v182, 1
    %v184 = vadd.f32 %v182, %v183
    %v185 = vrot.slane %v93, 4
    %v186 = vadd.f32 %v93, %v185
    %v187 = vrot.slane %v186, 2
    %v188 = vadd.f32 %v186, %v187
    %v189 = vrot.slane %v188, 1
    %v190 = vadd.f32 %v188, %v189
    %v191 = vrot.slane %v160, 4
    %v192 = vadd.f32 %v160, %v191
    %v193 = vrot.slane %v192, 2
    %v194 = vadd.f32 %v192, %v193
    %v195 = vrot.slane %v194, 1
    %v196 = vadd.f32 %v194, %v195
    %vm197 = vcmask 1040384
    %v198 = vsel %vm197, %v166, %v172
    %vm199 = vcmask 1041408
    %v200 = vsel %vm199, %v198, %v178
    %vm201 = vcmask 1042432
    %v202 = vsel %vm201, %v200, %v184
    %vm203 = vcmask 1043456
    %v204 = vsel %vm203, %v202, %v190
    %vm205 = vcmask 1044480
    %v206 = vsel %vm205, %v204, %v196
    %vm207 = vcmask 1045504
    %v208 = vsel %vm207, %v206, 0.0
    %209 = vst [vmem:[#allocation10] sm:$0xff] %v208
    // Predicated region
    $region38: #{tpu_custom_call.1} parent=1 // pred_check
      _
    $region39: #{tpu_custom_call.1} parent=1 // pred_check_branch
      %211 = sbr.rel (0) target = $region41
    $region40: #{tpu_custom_call.1} parent=1 // pred_region
      %s213 = ssub.s32 128, 128
      %214 = vsyncadd [#allocation4], %s213
      %s216 = sshll.u32 [#allocation10], 4
      %s217 = int_to_ptr.vmem [resolvable:$true] %s216
      %219 = dma.vmem_to_hbm [thread:$0]  %s217, 128, %s5, [#allocation4]
    $region41: #{tpu_custom_call.1} parent=1 // pred_fallthru
      _
    // Predicated region
    $region42: #{tpu_custom_call.1} parent=1 // pred_check
      _
    $region43: #{tpu_custom_call.1} parent=1 // pred_check_branch
      %221 = sbr.rel (0) target = $region45
    $region44: #{tpu_custom_call.1} parent=1 // pred_region
      %222 = dma.done [#allocation4], 128
    $region45: #{tpu_custom_call.1} parent=1 // pred_fallthru
      _
    %223 = vsyncpa [#allocation3], 1
    %224 = vsyncpa [#allocation6], 1
    %225 = vsyncpa [#allocation9], 1
    %226 = vsyncpa [#allocation4], 1

</llo_original>
